<compile_context>
chip_gen: v7x
topology: tpu7x:2x2x1
jax: 0.10.0
libtpu: 0.0.40
codegen_flags: <defaults>
</compile_context>

<pallas_src>
import jax
import jax.numpy as jnp
from jax.experimental import pallas as pl
from jax.experimental.pallas import tpu as pltpu


# ----------------------------------------------------------------------------- kernel
def classifier_kernel(x_ref, gamma_ref, beta_ref, wt_ref, b_ref, o_ref):
    # x: (tb, D)   gamma/beta: (1, D)   wt: (D, tc) pre-transposed   b: (1, tc)
    x = x_ref[...].astype(jnp.float32)

    # ---- LayerNorm over the embedding dimension (f32 statistics, eps=1e-5) ----
    mean = jnp.mean(x, axis=-1, keepdims=True)
    centered = x - mean
    var = jnp.mean(centered * centered, axis=-1, keepdims=True)
    # Fused affine: scale = gamma * rsqrt(var + eps)
    scale = gamma_ref[...].astype(jnp.float32) * jax.lax.rsqrt(var + 1e-5)
    xn = centered * scale + beta_ref[...].astype(jnp.float32)

    # ---- Linear head: xn @ Wt + b  (MXU in wt's dtype, f32 accumulate) ----
    out = jnp.dot(xn.astype(wt_ref.dtype), wt_ref[...],
                  preferred_element_type=jnp.float32)
    out = out + b_ref[...]
    o_ref[...] = out.astype(o_ref.dtype)


# ----------------------------------------------------------------------- tiling utils
def _round_up(x, m):
    return (x + m - 1) // m * m


def _vmem_budget():
    """Generation-aware VMEM tile budget + scoped limit."""
    try:
        cap = int(pltpu.get_tpu_info().vmem_capacity_bytes)
    except Exception:
        cap = 64 * 1024 * 1024  # conservative (v7x per-TC VMEM)
    budget = min(56 * 1024 * 1024, cap // 2)           # ~56 MiB on 128 MiB, 32 MiB on v7x
    vmem_limit = min(cap - (8 << 20), budget + (16 << 20))
    return budget, vmem_limit


def _select_class_tile(D, C, w_itemsize, budget):
    """Lane-dense class tile; 256-aligned when big enough (v6e/v7x MXU N-dim)."""
    tc = _round_up(C, 128)
    if tc >= 256:
        tc = _round_up(tc, 256)
    tc = min(tc, 2048)
    # keep ~2 double-buffered weight tiles within half the budget
    while tc > 128 and 2 * D * tc * w_itemsize > budget // 2:
        tc -= 256 if tc > 256 else 128
    return max(tc, 128)


def _select_batch_tile(B, D, tc, x_itemsize, w_itemsize, out_itemsize, budget):
    tb = min(_round_up(B, 8), 1024)

    def fits(tb_):
        x_bytes = 2 * tb_ * D * x_itemsize          # double-buffered x tile
        w_bytes = 2 * D * tc * w_itemsize           # double-buffered weight tile
        o_bytes = 2 * tb_ * tc * out_itemsize       # double-buffered output tile
        ln_bytes = 2 * tb_ * D * 4                  # f32 LN temporaries headroom
        return x_bytes + w_bytes + o_bytes + ln_bytes <= budget

    while tb > 8 and not fits(tb):
        tb -= 8
    return tb


# ----------------------------------------------------------------------------- wrapper
def prepare_classifier_params(w, b, gamma, beta, *, class_tile=None, matmul_dtype=None):
    """One-time parameter preprocessing (pad + transpose weight, pad bias).

    Keep the returned dict and reuse it across forward calls so the weight
    transpose / padding never re-traverses HBM per call.
    """
    C, D = w.shape
    if matmul_dtype is None:
        # bf16 MXU operands (f32 accumulate) when the params are f32 — numerics-approved
        matmul_dtype = jnp.bfloat16 if w.dtype == jnp.dtype(jnp.float32) else w.dtype
    budget, _ = _vmem_budget()
    w_itemsize = jnp.dtype(matmul_dtype).itemsize
    tc = class_tile if class_tile is not None else _select_class_tile(D, C, w_itemsize, budget)
    Cp = _round_up(C, tc)

    wt = jnp.pad(w, ((0, Cp - C), (0, 0))).T.astype(matmul_dtype)          # (D, Cp)
    bp = jnp.pad(b.astype(jnp.float32), (0, Cp - C)).reshape(1, Cp)        # (1, Cp)
    gamma2 = gamma.astype(jnp.float32).reshape(1, D)
    beta2 = beta.astype(jnp.float32).reshape(1, D)
    return dict(wt=wt, b=bp, gamma=gamma2, beta=beta2, C=C, D=D, class_tile=tc)


def classifier_forward(x, params, *, batch_tile=None):
    B = x.shape[0]
    x2d = x.reshape(B, -1)                         # x.view(B, -1)
    D = x2d.shape[1]
    wt, bp = params["wt"], params["b"]
    gamma2, beta2 = params["gamma"], params["beta"]
    C, tc = params["C"], params["class_tile"]
    if params["D"] != D:
        raise ValueError("flattened feature dim does not match prepared params")
    Cp = wt.shape[1]

    budget, vmem_limit = _vmem_budget()
    x_itemsize = jnp.dtype(x2d.dtype).itemsize
    w_itemsize = jnp.dtype(wt.dtype).itemsize
    out_itemsize = x_itemsize

    tb = batch_tile if batch_tile is not None else _select_batch_tile(
        B, D, tc, x_itemsize, w_itemsize, out_itemsize, budget)
    n_b = pl.cdiv(B, tb)
    n_c = Cp // tc
    # v7x dual-TC occupancy: avoid a 1x1 grid when the batch can be split.
    if n_b == 1 and n_c == 1 and B > 8:
        tb = _round_up((B + 1) // 2, 8)
        n_b = pl.cdiv(B, tb)

    # Traffic-aware grid ordering: keep the larger operand resident on the inner axis.
    w_bytes = D * Cp * w_itemsize
    x_bytes = B * D * x_itemsize
    batch_outer_traffic = x_bytes + n_b * w_bytes      # batch outer, class inner
    class_outer_traffic = w_bytes + n_c * x_bytes      # class outer, batch inner
    class_outer = class_outer_traffic < batch_outer_traffic

    if class_outer:
        grid = (n_c, n_b)
        x_map = lambda j, i: (i, 0)
        ln_map = lambda j, i: (0, 0)
        w_map = lambda j, i: (0, j)
        bias_map = lambda j, i: (0, j)
        o_map = lambda j, i: (i, j)
    else:
        grid = (n_b, n_c)
        x_map = lambda i, j: (i, 0)
        ln_map = lambda i, j: (0, 0)
        w_map = lambda i, j: (0, j)
        bias_map = lambda i, j: (0, j)
        o_map = lambda i, j: (i, j)

    out = pl.pallas_call(
        classifier_kernel,
        out_shape=jax.ShapeDtypeStruct((B, Cp), x2d.dtype),
        grid_spec=pltpu.PrefetchScalarGridSpec(
            num_scalar_prefetch=0,
            grid=grid,
            in_specs=[
                pl.BlockSpec((tb, D), x_map),     # x tile (boundary rows masked on store)
                pl.BlockSpec((1, D), ln_map),     # LayerNorm gamma
                pl.BlockSpec((1, D), ln_map),     # LayerNorm beta
                pl.BlockSpec((D, tc), w_map),     # pre-transposed weight tile
                pl.BlockSpec((1, tc), bias_map),  # bias tile
            ],
            out_specs=pl.BlockSpec((tb, tc), o_map),
        ),
        compiler_params=pltpu.CompilerParams(
            dimension_semantics=("parallel", "parallel"),
            vmem_limit_bytes=vmem_limit,
        ),
    )(x2d, gamma2, beta2, wt, bp)
    return out[:, :C]


# ---------------------------------------------------------------------------- reference
def classifier_ref(x, gamma, beta, w, b):
    B = x.shape[0]
    x2d = x.reshape(B, -1).astype(jnp.float32)
    mean = jnp.mean(x2d, axis=-1, keepdims=True)
    var = jnp.mean((x2d - mean) ** 2, axis=-1, keepdims=True)
    xn = (x2d - mean) * jax.lax.rsqrt(var + 1e-5) * gamma + beta
    return xn @ w.T.astype(jnp.float32) + b


if __name__ == "__main__":
    # Small shapes consistent with the module: embed_dim=32, nb_base_classes=10
    embed_dim = 32
    nb_base_classes = 10
    batch = 8

    key = jax.random.PRNGKey(0)
    kx, kw, kb = jax.random.split(key, 3)

    x = jax.random.normal(kx, (batch, embed_dim), dtype=jnp.float32)
    # nn.LayerNorm default init: weight=1, bias=0
    gamma = jnp.ones((embed_dim,), dtype=jnp.float32)
    beta = jnp.zeros((embed_dim,), dtype=jnp.float32)
    # nn.Linear-style uniform init (deterministic)
    bound = 1.0 / (embed_dim ** 0.5)
    w = jax.random.uniform(kw, (nb_base_classes, embed_dim),
                           minval=-bound, maxval=bound, dtype=jnp.float32)
    b = jax.random.uniform(kb, (nb_base_classes,),
                           minval=-bound, maxval=bound, dtype=jnp.float32)

    ref = classifier_ref(x, gamma, beta, w, b)

    # Default fast path: bf16 MXU operands with f32 accumulation.
    params_fast = prepare_classifier_params(w, b, gamma, beta)
    out_fast = jax.block_until_ready(classifier_forward(x, params_fast))
    assert out_fast.shape == (batch, nb_base_classes)
    assert jnp.allclose(out_fast, ref, atol=2e-2, rtol=2e-2), "bf16 path mismatch vs reference"

    # Strict f32 path matches the PyTorch reference tightly.
    params_f32 = prepare_classifier_params(w, b, gamma, beta, matmul_dtype=jnp.float32)
    out_f32 = jax.block_until_ready(classifier_forward(x, params_f32))
    assert out_f32.shape == (batch, nb_base_classes)
    assert jnp.allclose(out_f32, ref, atol=1e-4, rtol=1e-4), "f32 path mismatch vs reference"

    print("KERNEL_OK")
</pallas_src>

<mosaic_0001>
module attributes {stable_mosaic.version = 11 : i64} {
  func.func @classifier_kernel(%arg0: i32, %arg1: i32, %arg2: memref<8x32xf32, #tpu.memory_space<vmem>>, %arg3: memref<1x32xf32, #tpu.memory_space<vmem>>, %arg4: memref<1x32xf32, #tpu.memory_space<vmem>>, %arg5: memref<32x128xbf16, #tpu.memory_space<vmem>>, %arg6: memref<1x128xf32, #tpu.memory_space<vmem>>, %arg7: memref<8x128xf32, #tpu.memory_space<vmem>>) attributes {dimension_semantics = [#tpu.dimension_semantics<parallel>, #tpu.dimension_semantics<parallel>], iteration_bounds = array<i64: 1, 1>, scalar_prefetch = 0 : i64, scratch_operands = 0 : i64, tpu.core_type = #tpu.core_type<tc>, window_params = [{transform_indices = @transform_0, window_bounds = array<i64: 8, 32>}, {pipeline_mode = #tpu.pipeline_mode<synchronous>, transform_indices = @transform_1, window_bounds = array<i64: 1, 32>}, {pipeline_mode = #tpu.pipeline_mode<synchronous>, transform_indices = @transform_2, window_bounds = array<i64: 1, 32>}, {transform_indices = @transform_3, window_bounds = array<i64: 32, 128>}, {transform_indices = @transform_4, window_bounds = array<i64: 1, 128>}, {transform_indices = @transform_5, window_bounds = array<i64: 8, 128>}]} {
    %c0 = arith.constant 0 : index
    %c0_0 = arith.constant 0 : index
    %0 = vector.load %arg2[%c0, %c0_0] : memref<8x32xf32, #tpu.memory_space<vmem>>, vector<8x32xf32>
    %cst = arith.constant dense<0.000000e+00> : vector<8xf32>
    %1 = vector.multi_reduction <add>, %0, %cst [1] : vector<8x32xf32> to vector<8xf32>
    %2 = vector.shape_cast %1 : vector<8xf32> to vector<8x1xf32>
    %cst_1 = arith.constant 3.200000e+01 : f32
    %3 = vector.broadcast %cst_1 : f32 to vector<8x1xf32>
    %4 = arith.divf %2, %3 : vector<8x1xf32>
    %5 = vector.broadcast %4 : vector<8x1xf32> to vector<8x32xf32>
    %6 = arith.subf %0, %5 : vector<8x32xf32>
    %7 = arith.mulf %6, %6 : vector<8x32xf32>
    %cst_2 = arith.constant dense<0.000000e+00> : vector<8xf32>
    %8 = vector.multi_reduction <add>, %7, %cst_2 [1] : vector<8x32xf32> to vector<8xf32>
    %9 = vector.shape_cast %8 : vector<8xf32> to vector<8x1xf32>
    %cst_3 = arith.constant 3.200000e+01 : f32
    %10 = vector.broadcast %cst_3 : f32 to vector<8x1xf32>
    %11 = arith.divf %9, %10 : vector<8x1xf32>
    %c0_4 = arith.constant 0 : index
    %c0_5 = arith.constant 0 : index
    %12 = vector.load %arg3[%c0_4, %c0_5] : memref<1x32xf32, #tpu.memory_space<vmem>>, vector<1x32xf32>
    %cst_6 = arith.constant 9.99999974E-6 : f32
    %13 = vector.broadcast %cst_6 : f32 to vector<8x1xf32>
    %14 = arith.addf %11, %13 : vector<8x1xf32>
    %15 = math.rsqrt %14 : vector<8x1xf32>
    %16 = vector.broadcast %12 : vector<1x32xf32> to vector<8x32xf32>
    %17 = vector.broadcast %15 : vector<8x1xf32> to vector<8x32xf32>
    %18 = arith.mulf %16, %17 : vector<8x32xf32>
    %19 = arith.mulf %6, %18 : vector<8x32xf32>
    %c0_7 = arith.constant 0 : index
    %c0_8 = arith.constant 0 : index
    %20 = vector.load %arg4[%c0_7, %c0_8] : memref<1x32xf32, #tpu.memory_space<vmem>>, vector<1x32xf32>
    %21 = vector.broadcast %20 : vector<1x32xf32> to vector<8x32xf32>
    %22 = arith.addf %19, %21 : vector<8x32xf32>
    %23 = arith.truncf %22 : vector<8x32xf32> to vector<8x32xbf16>
    %c0_9 = arith.constant 0 : index
    %c0_10 = arith.constant 0 : index
    %24 = vector.load %arg5[%c0_9, %c0_10] : memref<32x128xbf16, #tpu.memory_space<vmem>>, vector<32x128xbf16>
    %cst_11 = arith.constant dense<0.000000e+00> : vector<8x128xf32>
    %25 = tpu.matmul %23, %24, %cst_11 {dimension_numbers = #tpu.dot_dimension_numbers<[1], [0], [0], [1], [0, 0, 1, 1], [], []>} : vector<8x32xbf16>, vector<32x128xbf16>, vector<8x128xf32> -> vector<8x128xf32>
    %c0_12 = arith.constant 0 : index
    %c0_13 = arith.constant 0 : index
    %26 = vector.load %arg6[%c0_12, %c0_13] : memref<1x128xf32, #tpu.memory_space<vmem>>, vector<1x128xf32>
    %27 = vector.broadcast %26 : vector<1x128xf32> to vector<8x128xf32>
    %28 = arith.addf %25, %27 : vector<8x128xf32>
    %c0_14 = arith.constant 0 : index
    %c0_15 = arith.constant 0 : index
    %29 = vector.load %arg7[%c0_14, %c0_15] : memref<8x128xf32, #tpu.memory_space<vmem>>, vector<8x128xf32>
    tpu.vector_store %arg7[%c0_14, %c0_15], %28 {strides = array<i32>} : memref<8x128xf32, #tpu.memory_space<vmem>>, vector<8x128xf32>,
    return
  }
  func.func @transform_0(%arg0: i32, %arg1: i32) -> (i32, i32) {
    %c0_i32 = arith.constant 0 : i32
    %c0_i32_0 = arith.constant 0 : i32
    return %arg0, %c0_i32 : i32, i32
  }
  func.func @transform_1(%arg0: i32, %arg1: i32) -> (i32, i32) {
    %c0_i32 = arith.constant 0 : i32
    %c0_i32_0 = arith.constant 0 : i32
    %c0_i32_1 = arith.constant 0 : i32
    return %c0_i32, %c0_i32_0 : i32, i32
  }
  func.func @transform_2(%arg0: i32, %arg1: i32) -> (i32, i32) {
    %c0_i32 = arith.constant 0 : i32
    %c0_i32_0 = arith.constant 0 : i32
    %c0_i32_1 = arith.constant 0 : i32
    return %c0_i32, %c0_i32_0 : i32, i32
  }
  func.func @transform_3(%arg0: i32, %arg1: i32) -> (i32, i32) {
    %c0_i32 = arith.constant 0 : i32
    %c0_i32_0 = arith.constant 0 : i32
    return %c0_i32, %arg1 : i32, i32
  }
  func.func @transform_4(%arg0: i32, %arg1: i32) -> (i32, i32) {
    %c0_i32 = arith.constant 0 : i32
    %c0_i32_0 = arith.constant 0 : i32
    return %c0_i32, %arg1 : i32, i32
  }
  func.func @transform_5(%arg0: i32, %arg1: i32) -> (i32, i32) {
    %c0_i32 = arith.constant 0 : i32
    return %arg0, %arg1 : i32, i32
  }
}

</mosaic_0001>

<llo_original>
// kernel: tpu_custom_call.1
$region0: #{tpu_custom_call.1}
  #allocation0 [shape = 'u32[]', space=smem, size = 0x4, offset = 0x4, fixed_abs, tag = 'smem constant byte address 0x4 - core index']
  #allocation1 [shape = 'u32[144,128]{1,0:T(1,128)}', space=vmem, size = 0x12000, scoped, tag = 'internal scratch']
  %s0 = inlined_call_operand.hbm [shape: f32[8,32], index: 0, kind: input, shape index: {}]
  %s1 = inlined_call_operand.vmem [shape: f32[1,32], index: 1, kind: input, shape index: {}]
  %s2 = inlined_call_operand.vmem [shape: f32[1,32], index: 2, kind: input, shape index: {}]
  %s3 = inlined_call_operand.hbm [shape: bf16[32,128], index: 3, kind: input, shape index: {}]
  %s4 = inlined_call_operand.vmem [shape: f32[1,128], index: 4, kind: input, shape index: {}]
  %s5 = inlined_call_operand.hbm [shape: f32[8,128], index: 5, kind: output, shape index: {}]
  %s6 = sld [smem:[#allocation0]]
  $region38: #{tpu_custom_call.1} parent=0
    _
  %s8 = ssub.s32 1, %s6
  %s9 = scalar_select 0, %s8, %s6
  $region1: #{tpu_custom_call.1} parent=0
    #allocation2 [shape = 'u8[4096]{0}', space=vmem, size = 0x1000, scoped, tag = 'input window, operand 0, single buffered']
    #allocation3 [shape = 's32[1]{0}', space=sflag, size = 0x4, scoped, tag = 'scoped memory for tpu_custom_call.1']
    #allocation4 [shape = 's32[1]{0}', space=sflag, size = 0x4, scoped, tag = 'scoped memory for tpu_custom_call.1']
    #allocation5 [shape = 'u8[8192]{0}', space=vmem, size = 0x2000, scoped, tag = 'input window, operand 3, single buffered']
    #allocation6 [shape = 's32[1]{0}', space=sflag, size = 0x4, scoped, tag = 'scoped memory for tpu_custom_call.1']
    #allocation7 [shape = 'u8[4096]{0}', space=vmem, size = 0x1000, scoped, tag = 'output window, operand 0, single buffered']
    %10 = vsyncpa [#allocation3], 0
    %11 = vsyncpa [#allocation6], 0
    %12 = vsyncpa [#allocation4], 0
    // Predicated region
    $region2: #{tpu_custom_call.1} parent=1 // pred_check
      _
    $region3: #{tpu_custom_call.1} parent=1 // pred_check_branch
      %14 = sbr.rel (0) target = $region5
    $region4: #{tpu_custom_call.1} parent=1 // pred_region
      %s16 = ssub.s32 128, 128
      %17 = vsyncadd [#allocation3], %s16
      %s19 = sshll.u32 [#allocation2], 4
      %s20 = int_to_ptr.vmem [resolvable:$true] %s19
      %22 = dma.hbm_to_vmem [thread:$0]  %s0, 128, %s20, [#allocation3]
    $region5: #{tpu_custom_call.1} parent=1 // pred_fallthru
      _
    // Predicated region
    $region6: #{tpu_custom_call.1} parent=1 // pred_check
      _
    $region7: #{tpu_custom_call.1} parent=1 // pred_check_branch
      %24 = sbr.rel (0) target = $region9
    $region8: #{tpu_custom_call.1} parent=1 // pred_region
      _
    $region9: #{tpu_custom_call.1} parent=1 // pred_fallthru
      _
    // Predicated region
    $region10: #{tpu_custom_call.1} parent=1 // pred_check
      _
    $region11: #{tpu_custom_call.1} parent=1 // pred_check_branch
      %26 = sbr.rel (0) target = $region13
    $region12: #{tpu_custom_call.1} parent=1 // pred_region
      _
    $region13: #{tpu_custom_call.1} parent=1 // pred_fallthru
      _
    // Predicated region
    $region14: #{tpu_custom_call.1} parent=1 // pred_check
      _
    $region15: #{tpu_custom_call.1} parent=1 // pred_check_branch
      %28 = sbr.rel (0) target = $region17
    $region16: #{tpu_custom_call.1} parent=1 // pred_region
      %s30 = ssub.s32 256, 256
      %31 = vsyncadd [#allocation6], %s30
      %s32 = sshll.u32 [#allocation5], 4
      %s33 = int_to_ptr.vmem [resolvable:$true] %s32
      %38 = dma.hbm_to_vmem [thread:$0]  %s3, 256, %s33, [#allocation6], 64, 64, 4
    $region17: #{tpu_custom_call.1} parent=1 // pred_fallthru
      _
    // Predicated region
    $region18: #{tpu_custom_call.1} parent=1 // pred_check
      _
    $region19: #{tpu_custom_call.1} parent=1 // pred_check_branch
      %40 = sbr.rel (0) target = $region21
    $region20: #{tpu_custom_call.1} parent=1 // pred_region
      _
    $region21: #{tpu_custom_call.1} parent=1 // pred_fallthru
      _
    // Predicated region
    $region22: #{tpu_custom_call.1} parent=1 // pred_check
      _
    $region23: #{tpu_custom_call.1} parent=1 // pred_check_branch
      %42 = sbr.rel (0) target = $region25
    $region24: #{tpu_custom_call.1} parent=1 // pred_region
      %43 = dma.done [#allocation3], 128
    $region25: #{tpu_custom_call.1} parent=1 // pred_fallthru
      _
    // Predicated region
    $region26: #{tpu_custom_call.1} parent=1 // pred_check
      _
    $region27: #{tpu_custom_call.1} parent=1 // pred_check_branch
      %45 = sbr.rel (0) target = $region29
    $region28: #{tpu_custom_call.1} parent=1 // pred_region
      %46 = dma.done [#allocation6], 256
    $region29: #{tpu_custom_call.1} parent=1 // pred_fallthru
      _
    %v48 = vld [vmem:[#allocation2] sm:$0xff]
    %vm49 = vcmask 261120
    %v50 = vsel %vm49, %v48, 0.0
    %51 = vadd.xlane.f32.xlu0 %v50
    %v52 = vpop.xlane.xlu0 %51
    %v53 = vrcp.pop 32.0
    %v54 = vmul.f32 %v52, %v53
    %v55 = vsub.f32 %v48, %v54
    %v56 = vmul.f32 %v55, %v55
    %v57 = vsel %vm49, %v56, 0.0
    %58 = vadd.xlane.f32.xlu0 %v57
    %v59 = vpop.xlane.xlu0 %58
    %v60 = vmul.f32 %v59, %v53
    %v61 = vld [vmem:[%s1] sm:$0x1]
    %v62 = vadd.f32 %v60, 1e-05
    %v63 = vrsqrt.pop %v62
    %v65 = vlaneseq
    %v66 = vshrl.u32 %v65, 7
    %v67 = vsub.s32 0, %v66
    %v68 = vrot.slane %v61, %v67
    %v70 = vmul.f32 %v68, %v63
    %v71 = vmul.f32 %v55, %v70
    %v72 = vld [vmem:[%s2] sm:$0x1]
    %v74 = vlaneseq
    %v75 = vshrl.u32 %v74, 7
    %v76 = vsub.s32 0, %v75
    %v77 = vrot.slane %v72, %v76
    %v79 = vadd.f32 %v71, %v77
    %v80 = vpack.c.bf16 %v79, %v79
    %v81 = vld [vmem:[#allocation5] sm:$0xf]
    %v82 = vld [vmem:[#allocation5 + $0x4] sm:$0xf]
    %v83 = vld [vmem:[#allocation5 + $0x8] sm:$0xf]
    %v84 = vld [vmem:[#allocation5 + $0xc] sm:$0xf]
    %v85 = vld [vmem:[%s4] sm:$0x1]
    %v87 = vlaneseq
    %v88 = vshrl.u32 %v87, 7
    %v89 = vsub.s32 0, %v88
    %v90 = vrot.slane %v85, %v89
    %v96 = vunpack.c.l.b16 %v81
    %v97 = vunpack.c.l.b16 %v82
    %v98 = vunpack.c.l.b16 %v83
    %v99 = vunpack.c.l.b16 %v84
    %v100 = vpack.c.b16 %v97, %v96
    %v101 = vpack.c.b16 %v99, %v98
    %v105 = vsel %vm49, %v80, 0
    %107 = vmatprep.subr.bf16.mxu0 0
    %108 = vmatpush1.bf16.msra.mxu0 %v100
    %109 = vmatprep.subr.bf16.mxu0 0
    %110 = vmatpush1.bf16.msra.mxu0 %v101
    %111 = vmatprep.subr.bf16.mxu0 0
    %112 = vmatpush1.bf16.msra.mxu0 0
    %113 = vmatprep.subr.bf16.mxu0 0
    %114 = vmatpush1.bf16.msra.mxu0 0
    %115 = vmatprep.subr.bf16.mxu0 0
    %116 = vmatpush1.bf16.msra.mxu0 0
    %117 = vmatprep.subr.bf16.mxu0 0
    %118 = vmatpush1.bf16.msra.mxu0 0
    %119 = vmatprep.subr.bf16.mxu0 0
    %120 = vmatpush1.bf16.msra.mxu0 0
    %121 = vmatprep.subr.bf16.mxu0 0
    %122 = vmatpush1.bf16.msra.mxu0 0
    %123 = vmatprep.subr.bf16.mxu0 0
    %124 = vmatpush1.bf16.msra.mxu0 0
    %125 = vmatprep.subr.bf16.mxu0 0
    %126 = vmatpush1.bf16.msra.mxu0 0
    %127 = vmatprep.subr.bf16.mxu0 0
    %128 = vmatpush1.bf16.msra.mxu0 0
    %129 = vmatprep.subr.bf16.mxu0 0
    %130 = vmatpush1.bf16.msra.mxu0 0
    %131 = vmatprep.subr.bf16.mxu0 0
    %132 = vmatpush1.bf16.msra.mxu0 0
    %133 = vmatprep.subr.bf16.mxu0 0
    %134 = vmatpush1.bf16.msra.mxu0 0
    %135 = vmatprep.subr.bf16.mxu0 0
    %136 = vmatpush1.bf16.msra.mxu0 0
    %137 = vmatprep.subr.bf16.mxu0 0
    %138 = vmatpush1.bf16.msra.mxu0 0
    %139 = vmatprep.mubr.bf16.mxu0 0
    %140 = vmatmul.mubr.bf16.gmra.mrb[0].mxu0 %v105
    %v141 = vpop.f32.mrb[0].mxu0
    %v142 = vadd.f32 %v90, %v141
    %v143 = vpop.f32.mrb[0].mxu0
    %v144 = vpop.f32.mrb[0].mxu0
    %v145 = vpop.f32.mrb[0].mxu0
    %146 = vdwg.mxu0
    %147 = vst [vmem:[#allocation7] sm:$0xff] %v142
    // Predicated region
    $region30: #{tpu_custom_call.1} parent=1 // pred_check
      _
    $region31: #{tpu_custom_call.1} parent=1 // pred_check_branch
      %149 = sbr.rel (0) target = $region33
    $region32: #{tpu_custom_call.1} parent=1 // pred_region
      %s151 = ssub.s32 128, 128
      %152 = vsyncadd [#allocation4], %s151
      %s154 = sshll.u32 [#allocation7], 4
      %s155 = int_to_ptr.vmem [resolvable:$true] %s154
      %157 = dma.vmem_to_hbm [thread:$0]  %s155, 128, %s5, [#allocation4]
    $region33: #{tpu_custom_call.1} parent=1 // pred_fallthru
      _
    // Predicated region
    $region34: #{tpu_custom_call.1} parent=1 // pred_check
      _
    $region35: #{tpu_custom_call.1} parent=1 // pred_check_branch
      %159 = sbr.rel (0) target = $region37
    $region36: #{tpu_custom_call.1} parent=1 // pred_region
      %160 = dma.done [#allocation4], 128
    $region37: #{tpu_custom_call.1} parent=1 // pred_fallthru
      _
    %161 = vsyncpa [#allocation3], 1
    %162 = vsyncpa [#allocation6], 1
    %163 = vsyncpa [#allocation4], 1

</llo_original>
